<compile_context>
chip_gen: v6e
topology: v6e:2x2x1
jax: 0.10.0
libtpu: 0.0.40
codegen_flags: <defaults>
</compile_context>

<pallas_src>
import functools

import jax
import jax.numpy as jnp
from jax import lax
from jax.experimental import pallas as pl
from jax.experimental.pallas import tpu as pltpu


# ----------------------------------------------------------------------------
# FSConv2d weight construction (pure-JAX glue, mirrors FSConv2d._build_kernel)
# ----------------------------------------------------------------------------
def build_fs_weights(FS, in_ch, out_ch, ksize=3):
    k = in_ch * ksize * ksize
    L = FS.shape[0]
    s = L // out_ch
    zpad = jnp.zeros((k // 2,), FS.dtype)
    padded = jnp.concatenate([zpad, FS, zpad])
    rows = [padded[i * s:i * s + k] for i in range(out_ch)]
    w = jnp.stack(rows, 0).reshape(out_ch, in_ch, ksize, ksize)  # OIHW
    return w


# ----------------------------------------------------------------------------
# Pallas kernel: whole BasicBlock for one batch element, channel-major layout
# ----------------------------------------------------------------------------
def _basic_block_kernel(x_ref, w1_ref, w2_ref, s1_ref, b1_ref, s2_ref, b2_ref,
                        o_ref, col_ref, *, width):
    # x_ref : (1, C, H*W)  activations, channels on sublanes, pixels on lanes
    # w*_ref: (C, 9*C)     conv weights, im2col-packed: col = (dy*3+dx)*C + ci
    # s*/b* : (C, 1)       folded BatchNorm scale / shift
    # o_ref : (1, C, H*W)
    # col_ref: VMEM scratch (9*C, H*W) im2col buffer, reused by both convs
    _, C, HW = x_ref.shape
    W = width

    x = x_ref[0]                                              # (C, HW) f32

    # Per-lane pixel column index, for the left/right conv boundary masks.
    wpos = lax.broadcasted_iota(jnp.int32, (C, HW), 1) % W
    mask_l = wpos >= 1          # source column w-1 is inside the image
    mask_r = wpos <= W - 2      # source column w+1 is inside the image

    def im2col(a):
        # col[t*C:(t+1)*C, p] = a[:, p + s_t]  (zero outside the image),
        # tap t = dy*3+dx, flat offset s_t = (dy-1)*W + (dx-1).
        # Top/bottom halo rows are handled by the zero fill of the shift;
        # left/right halo columns by the per-lane masks.
        for dy in range(3):
            for dx in range(3):
                t = dy * 3 + dx
                s = (dy - 1) * W + (dx - 1)
                if s > 0:
                    sh = jnp.concatenate(
                        [a[:, s:], jnp.zeros((C, s), a.dtype)], axis=1)
                elif s < 0:
                    sh = jnp.concatenate(
                        [jnp.zeros((C, -s), a.dtype), a[:, :HW + s]], axis=1)
                else:
                    sh = a
                if dx == 0:
                    sh = jnp.where(mask_l, sh, 0.0)
                elif dx == 2:
                    sh = jnp.where(mask_r, sh, 0.0)
                col_ref[t * C:(t + 1) * C, :] = sh

    # --- bn1 + relu (folded affine) ; conv1 as one fused matmul, K = 9*C ---
    a1 = jnp.maximum(x * s1_ref[...] + b1_ref[...], 0.0)      # (C, HW)
    im2col(a1)
    # TODO(synk): on v6e/v7x the im2col buffer + weights could be bf16 for ~2x
    #             MXU throughput; kept f32 so the 5e-3 reference check always holds.
    y1 = jnp.dot(w1_ref[...], col_ref[...],
                 preferred_element_type=jnp.float32)          # (C, HW)

    # --- bn2 + relu ; conv2 ---
    a2 = jnp.maximum(y1 * s2_ref[...] + b2_ref[...], 0.0)
    im2col(a2)
    y2 = jnp.dot(w2_ref[...], col_ref[...],
                 preferred_element_type=jnp.float32)          # (C, HW)

    # --- residual add (lane-dense output store) ---
    o_ref[0] = (y2 + x).astype(o_ref.dtype)


# ----------------------------------------------------------------------------
# Wrapper: NCHW in/out (PyTorch convention), (C, H*W) inside the kernel
# ----------------------------------------------------------------------------
@functools.partial(jax.jit, static_argnames=("eps",))
def basic_block_pallas(x_nchw, w1_oihw, w2_oihw, bn1, bn2, eps=1e-5):
    N, C, H, W = x_nchw.shape
    HW = H * W
    assert w1_oihw.shape == (C, C, 3, 3) and w2_oihw.shape == (C, C, 3, 3)

    # NCHW -> (N, C, H*W) is a pure reshape (no HBM transpose).
    x = x_nchw.reshape(N, C, HW).astype(jnp.float32)

    # OIHW -> im2col-packed (Cout, 9*Cin), tap-major: column = (dy*3+dx)*C + ci
    def pack_w(w):
        return jnp.transpose(w, (0, 2, 3, 1)).reshape(C, 9 * C).astype(jnp.float32)

    w1 = pack_w(w1_oihw)
    w2 = pack_w(w2_oihw)

    # Fold BatchNorm (inference mode) into per-channel scale/shift, (C, 1).
    def fold_bn(p):
        g, b, m, v = p
        scale = (g / jnp.sqrt(v + eps)).astype(jnp.float32)
        shift = (b - m * scale).astype(jnp.float32)
        return scale.reshape(C, 1), shift.reshape(C, 1)

    s1, b1 = fold_bn(bn1)
    s2, b2 = fold_bn(bn2)

    grid_spec = pltpu.PrefetchScalarGridSpec(
        num_scalar_prefetch=0,
        grid=(N,),
        in_specs=[
            pl.BlockSpec((1, C, HW), lambda n: (n, 0, 0)),
            pl.BlockSpec((C, 9 * C), lambda n: (0, 0)),
            pl.BlockSpec((C, 9 * C), lambda n: (0, 0)),
            pl.BlockSpec((C, 1), lambda n: (0, 0)),
            pl.BlockSpec((C, 1), lambda n: (0, 0)),
            pl.BlockSpec((C, 1), lambda n: (0, 0)),
            pl.BlockSpec((C, 1), lambda n: (0, 0)),
        ],
        out_specs=pl.BlockSpec((1, C, HW), lambda n: (n, 0, 0)),
        scratch_shapes=[pltpu.VMEM((9 * C, HW), jnp.float32)],
    )

    # TODO(synk): for ResNet-sized feature maps, additionally tile the grid over
    #             H (1-row halo) and set vmem_limit_bytes for v7x's 64 MiB VMEM.
    out = pl.pallas_call(
        functools.partial(_basic_block_kernel, width=W),
        out_shape=jax.ShapeDtypeStruct((N, C, HW), jnp.float32),
        grid_spec=grid_spec,
        compiler_params=pltpu.CompilerParams(
            dimension_semantics=("parallel",)),   # batch axis -> megacore
    )(x, w1, w2, s1, b1, s2, b2)

    return out.reshape(N, C, H, W)


# ----------------------------------------------------------------------------
# Pure-JAX reference (for correctness check only)
# ----------------------------------------------------------------------------
def basic_block_ref(x, w1, w2, bn1, bn2, eps=1e-5):
    def bn(y, p):
        g, b, m, v = p
        rs = lambda a: a.reshape(1, -1, 1, 1)
        return (y - rs(m)) / jnp.sqrt(rs(v) + eps) * rs(g) + rs(b)

    def conv(y, w):
        return lax.conv_general_dilated(
            y, w, window_strides=(1, 1), padding=((1, 1), (1, 1)),
            dimension_numbers=("NCHW", "OIHW", "NCHW"),
            precision=lax.Precision.HIGHEST)

    out = jax.nn.relu(bn(x, bn1))
    out = conv(out, w1)
    out = jax.nn.relu(bn(out, bn2))
    out = conv(out, w2)
    return out + x


if __name__ == "__main__":
    key = jax.random.PRNGKey(0)
    ks = jax.random.split(key, 12)

    N, C, H, W = 2, 8, 16, 16          # batch=2, inplanes=planes=8, spatial=16
    comp_ratio, ksize = 4, 3
    L = C * C * ksize * ksize // comp_ratio

    x = jax.random.normal(ks[0], (N, C, H, W), jnp.float32)

    # FSConv2d parameters (FS vectors ~ N(0,1), as in nn.init.normal_)
    FS1 = jax.random.normal(ks[1], (L,), jnp.float32)
    FS2 = jax.random.normal(ks[2], (L,), jnp.float32)
    w1 = build_fs_weights(FS1, C, C, ksize)
    w2 = build_fs_weights(FS2, C, C, ksize)

    # BatchNorm parameters (inference): gamma, beta, running_mean, running_var
    bn1 = (jax.random.normal(ks[3], (C,)) * 0.1 + 1.0,
           jax.random.normal(ks[4], (C,)) * 0.1,
           jax.random.normal(ks[5], (C,)) * 0.1,
           jax.random.uniform(ks[6], (C,), minval=0.5, maxval=1.5))
    bn2 = (jax.random.normal(ks[7], (C,)) * 0.1 + 1.0,
           jax.random.normal(ks[8], (C,)) * 0.1,
           jax.random.normal(ks[9], (C,)) * 0.1,
           jax.random.uniform(ks[10], (C,), minval=0.5, maxval=1.5))

    out = basic_block_pallas(x, w1, w2, bn1, bn2)
    out = jax.block_until_ready(out)

    ref = basic_block_ref(x, w1, w2, bn1, bn2)
    err = float(jnp.max(jnp.abs(out - ref)) / (jnp.max(jnp.abs(ref)) + 1e-6))
    assert out.shape == (N, C, H, W) and out.dtype == jnp.float32
    assert err < 5e-3, f"mismatch vs reference: rel-max err = {err}"

    print("KERNEL_OK")
</pallas_src>

<mosaic_0001>
module attributes {stable_mosaic.version = 11 : i64} {
  func.func @_basic_block_kernel(%arg0: i32, %arg1: memref<1x8x256xf32, #tpu.memory_space<vmem>>, %arg2: memref<8x72xf32, #tpu.memory_space<vmem>>, %arg3: memref<8x72xf32, #tpu.memory_space<vmem>>, %arg4: memref<8x1xf32, #tpu.memory_space<vmem>>, %arg5: memref<8x1xf32, #tpu.memory_space<vmem>>, %arg6: memref<8x1xf32, #tpu.memory_space<vmem>>, %arg7: memref<8x1xf32, #tpu.memory_space<vmem>>, %arg8: memref<1x8x256xf32, #tpu.memory_space<vmem>>, %arg9: memref<72x256xf32, #tpu.memory_space<vmem>>) attributes {dimension_semantics = [#tpu.dimension_semantics<parallel>], iteration_bounds = array<i64: 2>, scalar_prefetch = 0 : i64, scratch_operands = 1 : i64, tpu.core_type = #tpu.core_type<tc>, window_params = [{transform_indices = @transform_0, window_bounds = array<i64: 1, 8, 256>}, {pipeline_mode = #tpu.pipeline_mode<synchronous>, transform_indices = @transform_1, window_bounds = array<i64: 8, 72>}, {pipeline_mode = #tpu.pipeline_mode<synchronous>, transform_indices = @transform_2, window_bounds = array<i64: 8, 72>}, {pipeline_mode = #tpu.pipeline_mode<synchronous>, transform_indices = @transform_3, window_bounds = array<i64: 8, 1>}, {pipeline_mode = #tpu.pipeline_mode<synchronous>, transform_indices = @transform_4, window_bounds = array<i64: 8, 1>}, {pipeline_mode = #tpu.pipeline_mode<synchronous>, transform_indices = @transform_5, window_bounds = array<i64: 8, 1>}, {pipeline_mode = #tpu.pipeline_mode<synchronous>, transform_indices = @transform_6, window_bounds = array<i64: 8, 1>}, {transform_indices = @transform_7, window_bounds = array<i64: 1, 8, 256>}]} {
    %c0 = arith.constant 0 : index
    %c0_0 = arith.constant 0 : index
    %c0_1 = arith.constant 0 : index
    %0 = vector.load %arg1[%c0, %c0_0, %c0_1] : memref<1x8x256xf32, #tpu.memory_space<vmem>>, vector<1x8x256xf32>
    %1 = vector.shape_cast %0 : vector<1x8x256xf32> to vector<8x256xf32>
    %2 = tpu.iota {dimensions = array<i32: 1>} : vector<8x256xi32>
    %c16_i32 = arith.constant 16 : i32
    %c0_i32 = arith.constant 0 : i32
    %3 = arith.cmpi eq, %c16_i32, %c0_i32 : i32
    %c1_i32 = arith.constant 1 : i32
    %4 = arith.select %3, %c1_i32, %c16_i32 : i32
    %5 = vector.broadcast %4 : i32 to vector<8x256xi32>
    %6 = arith.remsi %2, %5 : vector<8x256xi32>
    %c0_i32_2 = arith.constant 0 : i32
    %7 = vector.broadcast %c0_i32_2 : i32 to vector<8x256xi32>
    %8 = arith.cmpi ne, %6, %7 : vector<8x256xi32>
    %c0_i32_3 = arith.constant 0 : i32
    %9 = vector.broadcast %c0_i32_3 : i32 to vector<8x256xi32>
    %10 = arith.cmpi slt, %6, %9 : vector<8x256xi32>
    %c0_i32_4 = arith.constant 0 : i32
    %11 = arith.cmpi slt, %4, %c0_i32_4 : i32
    %12 = vector.broadcast %11 : i1 to vector<8x256xi1>
    %13 = vector.broadcast %12 : vector<8x256xi1> to vector<8x256xi1>
    %14 = arith.xori %10, %13 : vector<8x256xi1>
    %15 = arith.andi %14, %8 : vector<8x256xi1>
    %16 = vector.broadcast %4 : i32 to vector<8x256xi32>
    %17 = arith.addi %6, %16 : vector<8x256xi32>
    %18 = arith.select %15, %17, %6 : vector<8x256xi1>, vector<8x256xi32>
    %c1_i32_5 = arith.constant 1 : i32
    %19 = vector.broadcast %c1_i32_5 : i32 to vector<8x256xi32>
    %20 = arith.cmpi sge, %18, %19 : vector<8x256xi32>
    %c14_i32 = arith.constant 14 : i32
    %21 = vector.broadcast %c14_i32 : i32 to vector<8x256xi32>
    %22 = arith.cmpi sle, %18, %21 : vector<8x256xi32>
    %c0_6 = arith.constant 0 : index
    %c0_7 = arith.constant 0 : index
    %23 = vector.load %arg4[%c0_6, %c0_7] : memref<8x1xf32, #tpu.memory_space<vmem>>, vector<8x1xf32>
    %24 = vector.broadcast %23 : vector<8x1xf32> to vector<8x256xf32>
    %25 = arith.mulf %1, %24 : vector<8x256xf32>
    %c0_8 = arith.constant 0 : index
    %c0_9 = arith.constant 0 : index
    %26 = vector.load %arg5[%c0_8, %c0_9] : memref<8x1xf32, #tpu.memory_space<vmem>>, vector<8x1xf32>
    %27 = vector.broadcast %26 : vector<8x1xf32> to vector<8x256xf32>
    %28 = arith.addf %25, %27 : vector<8x256xf32>
    %cst = arith.constant 0.000000e+00 : f32
    %29 = vector.broadcast %cst : f32 to vector<8x256xf32>
    %30 = arith.maximumf %28, %29 : vector<8x256xf32>
    %cst_10 = arith.constant 0.000000e+00 : f32
    %31 = vector.broadcast %cst_10 : f32 to vector<8x17xf32>
    %32 = vector.extract_strided_slice %30 {offsets = [0, 0], sizes = [8, 239], strides = [1, 1]} : vector<8x256xf32> to vector<8x239xf32>
    %33 = tpu.concatenate %31, %32 in 1 : vector<8x17xf32>, vector<8x239xf32> -> vector<8x256xf32>
    %cst_11 = arith.constant 0.000000e+00 : f32
    %34 = vector.broadcast %cst_11 : f32 to vector<8x256xf32>
    %35 = arith.select %20, %33, %34 : vector<8x256xi1>, vector<8x256xf32>
    %c0_12 = arith.constant 0 : index
    %c0_13 = arith.constant 0 : index
    %36 = vector.load %arg9[%c0_12, %c0_13] : memref<72x256xf32, #tpu.memory_space<vmem>>, vector<8x256xf32>
    tpu.vector_store %arg9[%c0_12, %c0_13], %35 {strides = array<i32>} : memref<72x256xf32, #tpu.memory_space<vmem>>, vector<8x256xf32>,
    %cst_14 = arith.constant 0.000000e+00 : f32
    %37 = vector.broadcast %cst_14 : f32 to vector<8x16xf32>
    %38 = vector.extract_strided_slice %30 {offsets = [0, 0], sizes = [8, 240], strides = [1, 1]} : vector<8x256xf32> to vector<8x240xf32>
    %39 = tpu.concatenate %37, %38 in 1 : vector<8x16xf32>, vector<8x240xf32> -> vector<8x256xf32>
    %c8 = arith.constant 8 : index
    %c0_15 = arith.constant 0 : index
    %40 = vector.load %arg9[%c8, %c0_15] : memref<72x256xf32, #tpu.memory_space<vmem>>, vector<8x256xf32>
    tpu.vector_store %arg9[%c8, %c0_15], %39 {strides = array<i32>} : memref<72x256xf32, #tpu.memory_space<vmem>>, vector<8x256xf32>,
    %cst_16 = arith.constant 0.000000e+00 : f32
    %41 = vector.broadcast %cst_16 : f32 to vector<8x15xf32>
    %42 = vector.extract_strided_slice %30 {offsets = [0, 0], sizes = [8, 241], strides = [1, 1]} : vector<8x256xf32> to vector<8x241xf32>
    %43 = tpu.concatenate %41, %42 in 1 : vector<8x15xf32>, vector<8x241xf32> -> vector<8x256xf32>
    %cst_17 = arith.constant 0.000000e+00 : f32
    %44 = vector.broadcast %cst_17 : f32 to vector<8x256xf32>
    %45 = arith.select %22, %43, %44 : vector<8x256xi1>, vector<8x256xf32>
    %c16 = arith.constant 16 : index
    %c0_18 = arith.constant 0 : index
    %46 = vector.load %arg9[%c16, %c0_18] : memref<72x256xf32, #tpu.memory_space<vmem>>, vector<8x256xf32>
    tpu.vector_store %arg9[%c16, %c0_18], %45 {strides = array<i32>} : memref<72x256xf32, #tpu.memory_space<vmem>>, vector<8x256xf32>,
    %cst_19 = arith.constant 0.000000e+00 : f32
    %47 = vector.broadcast %cst_19 : f32 to vector<8x1xf32>
    %48 = vector.extract_strided_slice %30 {offsets = [0, 0], sizes = [8, 255], strides = [1, 1]} : vector<8x256xf32> to vector<8x255xf32>
    %49 = tpu.concatenate %47, %48 in 1 : vector<8x1xf32>, vector<8x255xf32> -> vector<8x256xf32>
    %cst_20 = arith.constant 0.000000e+00 : f32
    %50 = vector.broadcast %cst_20 : f32 to vector<8x256xf32>
    %51 = arith.select %20, %49, %50 : vector<8x256xi1>, vector<8x256xf32>
    %c24 = arith.constant 24 : index
    %c0_21 = arith.constant 0 : index
    %52 = vector.load %arg9[%c24, %c0_21] : memref<72x256xf32, #tpu.memory_space<vmem>>, vector<8x256xf32>
    tpu.vector_store %arg9[%c24, %c0_21], %51 {strides = array<i32>} : memref<72x256xf32, #tpu.memory_space<vmem>>, vector<8x256xf32>,
    %c32 = arith.constant 32 : index
    %c0_22 = arith.constant 0 : index
    %53 = vector.load %arg9[%c32, %c0_22] : memref<72x256xf32, #tpu.memory_space<vmem>>, vector<8x256xf32>
    tpu.vector_store %arg9[%c32, %c0_22], %30 {strides = array<i32>} : memref<72x256xf32, #tpu.memory_space<vmem>>, vector<8x256xf32>,
    %54 = vector.extract_strided_slice %30 {offsets = [0, 1], sizes = [8, 255], strides = [1, 1]} : vector<8x256xf32> to vector<8x255xf32>
    %cst_23 = arith.constant 0.000000e+00 : f32
    %55 = vector.broadcast %cst_23 : f32 to vector<8x1xf32>
    %56 = tpu.concatenate %54, %55 in 1 : vector<8x255xf32>, vector<8x1xf32> -> vector<8x256xf32>
    %cst_24 = arith.constant 0.000000e+00 : f32
    %57 = vector.broadcast %cst_24 : f32 to vector<8x256xf32>
    %58 = arith.select %22, %56, %57 : vector<8x256xi1>, vector<8x256xf32>
    %c40 = arith.constant 40 : index
    %c0_25 = arith.constant 0 : index
    %59 = vector.load %arg9[%c40, %c0_25] : memref<72x256xf32, #tpu.memory_space<vmem>>, vector<8x256xf32>
    tpu.vector_store %arg9[%c40, %c0_25], %58 {strides = array<i32>} : memref<72x256xf32, #tpu.memory_space<vmem>>, vector<8x256xf32>,
    %60 = vector.extract_strided_slice %30 {offsets = [0, 15], sizes = [8, 241], strides = [1, 1]} : vector<8x256xf32> to vector<8x241xf32>
    %cst_26 = arith.constant 0.000000e+00 : f32
    %61 = vector.broadcast %cst_26 : f32 to vector<8x15xf32>
    %62 = tpu.concatenate %60, %61 in 1 : vector<8x241xf32>, vector<8x15xf32> -> vector<8x256xf32>
    %cst_27 = arith.constant 0.000000e+00 : f32
    %63 = vector.broadcast %cst_27 : f32 to vector<8x256xf32>
    %64 = arith.select %20, %62, %63 : vector<8x256xi1>, vector<8x256xf32>
    %c48 = arith.constant 48 : index
    %c0_28 = arith.constant 0 : index
    %65 = vector.load %arg9[%c48, %c0_28] : memref<72x256xf32, #tpu.memory_space<vmem>>, vector<8x256xf32>
    tpu.vector_store %arg9[%c48, %c0_28], %64 {strides = array<i32>} : memref<72x256xf32, #tpu.memory_space<vmem>>, vector<8x256xf32>,
    %66 = vector.extract_strided_slice %30 {offsets = [0, 16], sizes = [8, 240], strides = [1, 1]} : vector<8x256xf32> to vector<8x240xf32>
    %cst_29 = arith.constant 0.000000e+00 : f32
    %67 = vector.broadcast %cst_29 : f32 to vector<8x16xf32>
    %68 = tpu.concatenate %66, %67 in 1 : vector<8x240xf32>, vector<8x16xf32> -> vector<8x256xf32>
    %c56 = arith.constant 56 : index
    %c0_30 = arith.constant 0 : index
    %69 = vector.load %arg9[%c56, %c0_30] : memref<72x256xf32, #tpu.memory_space<vmem>>, vector<8x256xf32>
    tpu.vector_store %arg9[%c56, %c0_30], %68 {strides = array<i32>} : memref<72x256xf32, #tpu.memory_space<vmem>>, vector<8x256xf32>,
    %70 = vector.extract_strided_slice %30 {offsets = [0, 17], sizes = [8, 239], strides = [1, 1]} : vector<8x256xf32> to vector<8x239xf32>
    %cst_31 = arith.constant 0.000000e+00 : f32
    %71 = vector.broadcast %cst_31 : f32 to vector<8x17xf32>
    %72 = tpu.concatenate %70, %71 in 1 : vector<8x239xf32>, vector<8x17xf32> -> vector<8x256xf32>
    %cst_32 = arith.constant 0.000000e+00 : f32
    %73 = vector.broadcast %cst_32 : f32 to vector<8x256xf32>
    %74 = arith.select %22, %72, %73 : vector<8x256xi1>, vector<8x256xf32>
    %c64 = arith.constant 64 : index
    %c0_33 = arith.constant 0 : index
    %75 = vector.load %arg9[%c64, %c0_33] : memref<72x256xf32, #tpu.memory_space<vmem>>, vector<8x256xf32>
    tpu.vector_store %arg9[%c64, %c0_33], %74 {strides = array<i32>} : memref<72x256xf32, #tpu.memory_space<vmem>>, vector<8x256xf32>,
    %c0_34 = arith.constant 0 : index
    %c0_35 = arith.constant 0 : index
    %76 = vector.load %arg2[%c0_34, %c0_35] : memref<8x72xf32, #tpu.memory_space<vmem>>, vector<8x72xf32>
    %c0_36 = arith.constant 0 : index
    %c0_37 = arith.constant 0 : index
    %77 = vector.load %arg9[%c0_36, %c0_37] : memref<72x256xf32, #tpu.memory_space<vmem>>, vector<72x256xf32>
    %cst_38 = arith.constant dense<0.000000e+00> : vector<8x256xf32>
    %78 = tpu.matmul %76, %77, %cst_38 {dimension_numbers = #tpu.dot_dimension_numbers<[1], [0], [0], [1], [0, 0, 1, 1], [], []>} : vector<8x72xf32>, vector<72x256xf32>, vector<8x256xf32> -> vector<8x256xf32>
    %c0_39 = arith.constant 0 : index
    %c0_40 = arith.constant 0 : index
    %79 = vector.load %arg6[%c0_39, %c0_40] : memref<8x1xf32, #tpu.memory_space<vmem>>, vector<8x1xf32>
    %80 = vector.broadcast %79 : vector<8x1xf32> to vector<8x256xf32>
    %81 = arith.mulf %78, %80 : vector<8x256xf32>
    %c0_41 = arith.constant 0 : index
    %c0_42 = arith.constant 0 : index
    %82 = vector.load %arg7[%c0_41, %c0_42] : memref<8x1xf32, #tpu.memory_space<vmem>>, vector<8x1xf32>
    %83 = vector.broadcast %82 : vector<8x1xf32> to vector<8x256xf32>
    %84 = arith.addf %81, %83 : vector<8x256xf32>
    %cst_43 = arith.constant 0.000000e+00 : f32
    %85 = vector.broadcast %cst_43 : f32 to vector<8x256xf32>
    %86 = arith.maximumf %84, %85 : vector<8x256xf32>
    %cst_44 = arith.constant 0.000000e+00 : f32
    %87 = vector.broadcast %cst_44 : f32 to vector<8x17xf32>
    %88 = vector.extract_strided_slice %86 {offsets = [0, 0], sizes = [8, 239], strides = [1, 1]} : vector<8x256xf32> to vector<8x239xf32>
    %89 = tpu.concatenate %87, %88 in 1 : vector<8x17xf32>, vector<8x239xf32> -> vector<8x256xf32>
    %cst_45 = arith.constant 0.000000e+00 : f32
    %90 = vector.broadcast %cst_45 : f32 to vector<8x256xf32>
    %91 = arith.select %20, %89, %90 : vector<8x256xi1>, vector<8x256xf32>
    %c0_46 = arith.constant 0 : index
    %c0_47 = arith.constant 0 : index
    %92 = vector.load %arg9[%c0_46, %c0_47] : memref<72x256xf32, #tpu.memory_space<vmem>>, vector<8x256xf32>
    tpu.vector_store %arg9[%c0_46, %c0_47], %91 {strides = array<i32>} : memref<72x256xf32, #tpu.memory_space<vmem>>, vector<8x256xf32>,
    %cst_48 = arith.constant 0.000000e+00 : f32
    %93 = vector.broadcast %cst_48 : f32 to vector<8x16xf32>
    %94 = vector.extract_strided_slice %86 {offsets = [0, 0], sizes = [8, 240], strides = [1, 1]} : vector<8x256xf32> to vector<8x240xf32>
    %95 = tpu.concatenate %93, %94 in 1 : vector<8x16xf32>, vector<8x240xf32> -> vector<8x256xf32>
    %c8_49 = arith.constant 8 : index
    %c0_50 = arith.constant 0 : index
    %96 = vector.load %arg9[%c8_49, %c0_50] : memref<72x256xf32, #tpu.memory_space<vmem>>, vector<8x256xf32>
    tpu.vector_store %arg9[%c8_49, %c0_50], %95 {strides = array<i32>} : memref<72x256xf32, #tpu.memory_space<vmem>>, vector<8x256xf32>,
    %cst_51 = arith.constant 0.000000e+00 : f32
    %97 = vector.broadcast %cst_51 : f32 to vector<8x15xf32>
    %98 = vector.extract_strided_slice %86 {offsets = [0, 0], sizes = [8, 241], strides = [1, 1]} : vector<8x256xf32> to vector<8x241xf32>
    %99 = tpu.concatenate %97, %98 in 1 : vector<8x15xf32>, vector<8x241xf32> -> vector<8x256xf32>
    %cst_52 = arith.constant 0.000000e+00 : f32
    %100 = vector.broadcast %cst_52 : f32 to vector<8x256xf32>
    %101 = arith.select %22, %99, %100 : vector<8x256xi1>, vector<8x256xf32>
    %c16_53 = arith.constant 16 : index
    %c0_54 = arith.constant 0 : index
    %102 = vector.load %arg9[%c16_53, %c0_54] : memref<72x256xf32, #tpu.memory_space<vmem>>, vector<8x256xf32>
    tpu.vector_store %arg9[%c16_53, %c0_54], %101 {strides = array<i32>} : memref<72x256xf32, #tpu.memory_space<vmem>>, vector<8x256xf32>,
    %cst_55 = arith.constant 0.000000e+00 : f32
    %103 = vector.broadcast %cst_55 : f32 to vector<8x1xf32>
    %104 = vector.extract_strided_slice %86 {offsets = [0, 0], sizes = [8, 255], strides = [1, 1]} : vector<8x256xf32> to vector<8x255xf32>
    %105 = tpu.concatenate %103, %104 in 1 : vector<8x1xf32>, vector<8x255xf32> -> vector<8x256xf32>
    %cst_56 = arith.constant 0.000000e+00 : f32
    %106 = vector.broadcast %cst_56 : f32 to vector<8x256xf32>
    %107 = arith.select %20, %105, %106 : vector<8x256xi1>, vector<8x256xf32>
    %c24_57 = arith.constant 24 : index
    %c0_58 = arith.constant 0 : index
    %108 = vector.load %arg9[%c24_57, %c0_58] : memref<72x256xf32, #tpu.memory_space<vmem>>, vector<8x256xf32>
    tpu.vector_store %arg9[%c24_57, %c0_58], %107 {strides = array<i32>} : memref<72x256xf32, #tpu.memory_space<vmem>>, vector<8x256xf32>,
    %c32_59 = arith.constant 32 : index
    %c0_60 = arith.constant 0 : index
    %109 = vector.load %arg9[%c32_59, %c0_60] : memref<72x256xf32, #tpu.memory_space<vmem>>, vector<8x256xf32>
    tpu.vector_store %arg9[%c32_59, %c0_60], %86 {strides = array<i32>} : memref<72x256xf32, #tpu.memory_space<vmem>>, vector<8x256xf32>,
    %110 = vector.extract_strided_slice %86 {offsets = [0, 1], sizes = [8, 255], strides = [1, 1]} : vector<8x256xf32> to vector<8x255xf32>
    %cst_61 = arith.constant 0.000000e+00 : f32
    %111 = vector.broadcast %cst_61 : f32 to vector<8x1xf32>
    %112 = tpu.concatenate %110, %111 in 1 : vector<8x255xf32>, vector<8x1xf32> -> vector<8x256xf32>
    %cst_62 = arith.constant 0.000000e+00 : f32
    %113 = vector.broadcast %cst_62 : f32 to vector<8x256xf32>
    %114 = arith.select %22, %112, %113 : vector<8x256xi1>, vector<8x256xf32>
    %c40_63 = arith.constant 40 : index
    %c0_64 = arith.constant 0 : index
    %115 = vector.load %arg9[%c40_63, %c0_64] : memref<72x256xf32, #tpu.memory_space<vmem>>, vector<8x256xf32>
    tpu.vector_store %arg9[%c40_63, %c0_64], %114 {strides = array<i32>} : memref<72x256xf32, #tpu.memory_space<vmem>>, vector<8x256xf32>,
    %116 = vector.extract_strided_slice %86 {offsets = [0, 15], sizes = [8, 241], strides = [1, 1]} : vector<8x256xf32> to vector<8x241xf32>
    %cst_65 = arith.constant 0.000000e+00 : f32
    %117 = vector.broadcast %cst_65 : f32 to vector<8x15xf32>
    %118 = tpu.concatenate %116, %117 in 1 : vector<8x241xf32>, vector<8x15xf32> -> vector<8x256xf32>
    %cst_66 = arith.constant 0.000000e+00 : f32
    %119 = vector.broadcast %cst_66 : f32 to vector<8x256xf32>
    %120 = arith.select %20, %118, %119 : vector<8x256xi1>, vector<8x256xf32>
    %c48_67 = arith.constant 48 : index
    %c0_68 = arith.constant 0 : index
    %121 = vector.load %arg9[%c48_67, %c0_68] : memref<72x256xf32, #tpu.memory_space<vmem>>, vector<8x256xf32>
    tpu.vector_store %arg9[%c48_67, %c0_68], %120 {strides = array<i32>} : memref<72x256xf32, #tpu.memory_space<vmem>>, vector<8x256xf32>,
    %122 = vector.extract_strided_slice %86 {offsets = [0, 16], sizes = [8, 240], strides = [1, 1]} : vector<8x256xf32> to vector<8x240xf32>
    %cst_69 = arith.constant 0.000000e+00 : f32
    %123 = vector.broadcast %cst_69 : f32 to vector<8x16xf32>
    %124 = tpu.concatenate %122, %123 in 1 : vector<8x240xf32>, vector<8x16xf32> -> vector<8x256xf32>
    %c56_70 = arith.constant 56 : index
    %c0_71 = arith.constant 0 : index
    %125 = vector.load %arg9[%c56_70, %c0_71] : memref<72x256xf32, #tpu.memory_space<vmem>>, vector<8x256xf32>
    tpu.vector_store %arg9[%c56_70, %c0_71], %124 {strides = array<i32>} : memref<72x256xf32, #tpu.memory_space<vmem>>, vector<8x256xf32>,
    %126 = vector.extract_strided_slice %86 {offsets = [0, 17], sizes = [8, 239], strides = [1, 1]} : vector<8x256xf32> to vector<8x239xf32>
    %cst_72 = arith.constant 0.000000e+00 : f32
    %127 = vector.broadcast %cst_72 : f32 to vector<8x17xf32>
    %128 = tpu.concatenate %126, %127 in 1 : vector<8x239xf32>, vector<8x17xf32> -> vector<8x256xf32>
    %cst_73 = arith.constant 0.000000e+00 : f32
    %129 = vector.broadcast %cst_73 : f32 to vector<8x256xf32>
    %130 = arith.select %22, %128, %129 : vector<8x256xi1>, vector<8x256xf32>
    %c64_74 = arith.constant 64 : index
    %c0_75 = arith.constant 0 : index
    %131 = vector.load %arg9[%c64_74, %c0_75] : memref<72x256xf32, #tpu.memory_space<vmem>>, vector<8x256xf32>
    tpu.vector_store %arg9[%c64_74, %c0_75], %130 {strides = array<i32>} : memref<72x256xf32, #tpu.memory_space<vmem>>, vector<8x256xf32>,
    %c0_76 = arith.constant 0 : index
    %c0_77 = arith.constant 0 : index
    %132 = vector.load %arg3[%c0_76, %c0_77] : memref<8x72xf32, #tpu.memory_space<vmem>>, vector<8x72xf32>
    %c0_78 = arith.constant 0 : index
    %c0_79 = arith.constant 0 : index
    %133 = vector.load %arg9[%c0_78, %c0_79] : memref<72x256xf32, #tpu.memory_space<vmem>>, vector<72x256xf32>
    %cst_80 = arith.constant dense<0.000000e+00> : vector<8x256xf32>
    %134 = tpu.matmul %132, %133, %cst_80 {dimension_numbers = #tpu.dot_dimension_numbers<[1], [0], [0], [1], [0, 0, 1, 1], [], []>} : vector<8x72xf32>, vector<72x256xf32>, vector<8x256xf32> -> vector<8x256xf32>
    %135 = arith.addf %134, %1 : vector<8x256xf32>
    %c0_81 = arith.constant 0 : index
    %c0_82 = arith.constant 0 : index
    %c0_83 = arith.constant 0 : index
    %136 = vector.load %arg8[%c0_81, %c0_82, %c0_83] : memref<1x8x256xf32, #tpu.memory_space<vmem>>, vector<1x8x256xf32>
    %137 = vector.shape_cast %136 : vector<1x8x256xf32> to vector<8x256xf32>
    %138 = vector.shape_cast %135 : vector<8x256xf32> to vector<1x8x256xf32>
    tpu.vector_store %arg8[%c0_81, %c0_82, %c0_83], %138 {strides = array<i32>} : memref<1x8x256xf32, #tpu.memory_space<vmem>>, vector<1x8x256xf32>,
    return
  }
  func.func @transform_0(%arg0: i32) -> (i32, i32, i32) {
    %c0_i32 = arith.constant 0 : i32
    %c0_i32_0 = arith.constant 0 : i32
    %c0_i32_1 = arith.constant 0 : i32
    return %arg0, %c0_i32, %c0_i32_0 : i32, i32, i32
  }
  func.func @transform_1(%arg0: i32) -> (i32, i32) {
    %c0_i32 = arith.constant 0 : i32
    %c0_i32_0 = arith.constant 0 : i32
    %c0_i32_1 = arith.constant 0 : i32
    return %c0_i32, %c0_i32_0 : i32, i32
  }
  func.func @transform_2(%arg0: i32) -> (i32, i32) {
    %c0_i32 = arith.constant 0 : i32
    %c0_i32_0 = arith.constant 0 : i32
    %c0_i32_1 = arith.constant 0 : i32
    return %c0_i32, %c0_i32_0 : i32, i32
  }
  func.func @transform_3(%arg0: i32) -> (i32, i32) {
    %c0_i32 = arith.constant 0 : i32
    %c0_i32_0 = arith.constant 0 : i32
    %c0_i32_1 = arith.constant 0 : i32
    return %c0_i32, %c0_i32_0 : i32, i32
  }
  func.func @transform_4(%arg0: i32) -> (i32, i32) {
    %c0_i32 = arith.constant 0 : i32
    %c0_i32_0 = arith.constant 0 : i32
    %c0_i32_1 = arith.constant 0 : i32
    return %c0_i32, %c0_i32_0 : i32, i32
  }
  func.func @transform_5(%arg0: i32) -> (i32, i32) {
    %c0_i32 = arith.constant 0 : i32
    %c0_i32_0 = arith.constant 0 : i32
    %c0_i32_1 = arith.constant 0 : i32
    return %c0_i32, %c0_i32_0 : i32, i32
  }
  func.func @transform_6(%arg0: i32) -> (i32, i32) {
    %c0_i32 = arith.constant 0 : i32
    %c0_i32_0 = arith.constant 0 : i32
    %c0_i32_1 = arith.constant 0 : i32
    return %c0_i32, %c0_i32_0 : i32, i32
  }
  func.func @transform_7(%arg0: i32) -> (i32, i32, i32) {
    %c0_i32 = arith.constant 0 : i32
    %c0_i32_0 = arith.constant 0 : i32
    %c0_i32_1 = arith.constant 0 : i32
    return %arg0, %c0_i32, %c0_i32_0 : i32, i32, i32
  }
}

</mosaic_0001>

<llo_original>
// kernel: basic_block_pallas.1
$region0: #{basic_block_pallas.1}
  #allocation0 [shape = 'u32[]', space=smem, size = 0x4, offset = 0x4, fixed_abs, tag = 'smem constant byte address 0x4 - core index']
  #allocation1 [shape = 'u32[144,128]{1,0:T(1,128)}', space=vmem, size = 0x12000, scoped, tag = 'internal scratch']
  #allocation2 [shape = 'f32[72,256]{1,0:T(8,128)}', space=vmem, size = 0x12000, scoped, tag = 'scratch operand']
  %s0 = inlined_call_operand.vmem [shape: f32[2,8,256], index: 0, kind: input, shape index: {}]
  %s1 = inlined_call_operand.vmem [shape: f32[8,72], index: 1, kind: input, shape index: {}]
  %s2 = inlined_call_operand.vmem [shape: f32[8,72], index: 2, kind: input, shape index: {}]
  %s3 = inlined_call_operand.vmem [shape: f32[8,1], index: 3, kind: input, shape index: {}]
  %s4 = inlined_call_operand.vmem [shape: f32[8,1], index: 4, kind: input, shape index: {}]
  %s5 = inlined_call_operand.vmem [shape: f32[8,1], index: 5, kind: input, shape index: {}]
  %s6 = inlined_call_operand.vmem [shape: f32[8,1], index: 6, kind: input, shape index: {}]
  %s7 = inlined_call_operand.vmem [shape: f32[2,8,256], index: 7, kind: output, shape index: {}]
  %s8 = sld [smem:[#allocation0]]
  $region61: #{basic_block_pallas.1} parent=0
    _
  %s10 = ssub.s32 1, %s8
  %s11 = scalar_select 0, %s10, %s8
  loop: start=0, step=1, limit=4
  $region2: #{basic_block_pallas.1} parent=0 // loop_pre_header
    _
  $region3: #{basic_block_pallas.1} parent=0 // loop_header
    %s13 = sphi 0, %s17
    %p14 = scmp.ge.s32.totalorder %s13, 4
    %s23 = sphi 0, %s25
    %s26 = sphi 0, %s23
    %s27 = sphi 0, %s26
    %s43 = sphi 0, %s27
    %s47 = sphi 0, %s47
    %s49 = sphi 0, %s47
    %s50 = sphi 0, %s49
    %s64 = sphi 0, %s50
    %s68 = sphi 0, %s68
    %s70 = sphi 0, %s68
    %s71 = sphi 0, %s70
    %s85 = sphi 0, %s71
    %s89 = sphi 0, %s89
    %s91 = sphi 0, %s89
    %s92 = sphi 0, %s91
    %s106 = sphi 0, %s92
    %s110 = sphi 0, %s110
    %s112 = sphi 0, %s110
    %s113 = sphi 0, %s112
    %s127 = sphi 0, %s113
    %s131 = sphi 0, %s131
    %s133 = sphi 0, %s131
    %s134 = sphi 0, %s133
    %s148 = sphi 0, %s134
    %s152 = sphi 0, %s152
    %s154 = sphi 0, %s152
    %s155 = sphi 0, %s154
    %s169 = sphi 0, %s155
    %s175 = sphi 0, %s177
    %s178 = sphi 0, %s175
    %s179 = sphi 0, %s178
    %s195 = sphi 0, %s179
  $region4: #{basic_block_pallas.1} parent=0 // loop_header_branch
    %16 = sbr.rel (%p14) target = $region8
  $region5: #{basic_block_pallas.1} parent=0 // loop_body
    %s18 = ssub.s32 %s13, 1
    %s19 = ssub.s32 %s13, 2
    %s20 = sadd.s32 %s13, 1
    %s21 = ssub.s32 %s13, %s20
    %p22 = scmp.eq.s32.totalorder %s21, 0
    %s24 = sadd.s32 %s23, 1
    %s25 = scalar_select %p22, %s23, %s24
    %p28 = pneg %p22
    %p29 = scmp.eq.s32.totalorder %s13, 1
    %p30 = por %p28, %p29
    %p31 = scmp.ne.s32.totalorder %s23, %s26
    %p32 = scmp.eq.s32.totalorder %s13, 0
    %p33 = por %p31, %p32
    %p34 = scmp.ne.s32.totalorder %s23, %s26
    %p35 = scmp.eq.s32.totalorder %s18, 1
    %p36 = por %p34, %p35
    %p37 = scmp.ne.s32.totalorder %s26, %s27
    %p38 = scmp.eq.s32.totalorder %s18, 0
    %p39 = por %p37, %p38
    %p40 = scmp.ne.s32.totalorder %s26, %s27
    %p41 = scmp.eq.s32.totalorder %s19, 1
    %p42 = por %p40, %p41
    %p44 = scmp.ne.s32.totalorder %s27, %s43
    %p45 = scmp.eq.s32.totalorder %s19, 0
    %p46 = por %p44, %p45
    %s48 = sadd.s32 %s47, 1
    %p51 = scmp.eq.s32.totalorder %s13, 1
    %p52 = scmp.ne.s32.totalorder %s47, %s49
    %p53 = scmp.eq.s32.totalorder %s13, 0
    %p54 = por %p52, %p53
    %p55 = scmp.ne.s32.totalorder %s47, %s49
    %p56 = scmp.eq.s32.totalorder %s18, 1
    %p57 = por %p55, %p56
    %p58 = scmp.ne.s32.totalorder %s49, %s50
    %p59 = scmp.eq.s32.totalorder %s18, 0
    %p60 = por %p58, %p59
    %p61 = scmp.ne.s32.totalorder %s49, %s50
    %p62 = scmp.eq.s32.totalorder %s19, 1
    %p63 = por %p61, %p62
    %p65 = scmp.ne.s32.totalorder %s50, %s64
    %p66 = scmp.eq.s32.totalorder %s19, 0
    %p67 = por %p65, %p66
    %s69 = sadd.s32 %s68, 1
    %p72 = scmp.eq.s32.totalorder %s13, 1
    %p73 = scmp.ne.s32.totalorder %s68, %s70
    %p74 = scmp.eq.s32.totalorder %s13, 0
    %p75 = por %p73, %p74
    %p76 = scmp.ne.s32.totalorder %s68, %s70
    %p77 = scmp.eq.s32.totalorder %s18, 1
    %p78 = por %p76, %p77
    %p79 = scmp.ne.s32.totalorder %s70, %s71
    %p80 = scmp.eq.s32.totalorder %s18, 0
    %p81 = por %p79, %p80
    %p82 = scmp.ne.s32.totalorder %s70, %s71
    %p83 = scmp.eq.s32.totalorder %s19, 1
    %p84 = por %p82, %p83
    %p86 = scmp.ne.s32.totalorder %s71, %s85
    %p87 = scmp.eq.s32.totalorder %s19, 0
    %p88 = por %p86, %p87
    %s90 = sadd.s32 %s89, 1
    %p93 = scmp.eq.s32.totalorder %s13, 1
    %p94 = scmp.ne.s32.totalorder %s89, %s91
    %p95 = scmp.eq.s32.totalorder %s13, 0
    %p96 = por %p94, %p95
    %p97 = scmp.ne.s32.totalorder %s89, %s91
    %p98 = scmp.eq.s32.totalorder %s18, 1
    %p99 = por %p97, %p98
    %p100 = scmp.ne.s32.totalorder %s91, %s92
    %p101 = scmp.eq.s32.totalorder %s18, 0
    %p102 = por %p100, %p101
    %p103 = scmp.ne.s32.totalorder %s91, %s92
    %p104 = scmp.eq.s32.totalorder %s19, 1
    %p105 = por %p103, %p104
    %p107 = scmp.ne.s32.totalorder %s92, %s106
    %p108 = scmp.eq.s32.totalorder %s19, 0
    %p109 = por %p107, %p108
    %s111 = sadd.s32 %s110, 1
    %p114 = scmp.eq.s32.totalorder %s13, 1
    %p115 = scmp.ne.s32.totalorder %s110, %s112
    %p116 = scmp.eq.s32.totalorder %s13, 0
    %p117 = por %p115, %p116
    %p118 = scmp.ne.s32.totalorder %s110, %s112
    %p119 = scmp.eq.s32.totalorder %s18, 1
    %p120 = por %p118, %p119
    %p121 = scmp.ne.s32.totalorder %s112, %s113
    %p122 = scmp.eq.s32.totalorder %s18, 0
    %p123 = por %p121, %p122
    %p124 = scmp.ne.s32.totalorder %s112, %s113
    %p125 = scmp.eq.s32.totalorder %s19, 1
    %p126 = por %p124, %p125
    %p128 = scmp.ne.s32.totalorder %s113, %s127
    %p129 = scmp.eq.s32.totalorder %s19, 0
    %p130 = por %p128, %p129
    %s132 = sadd.s32 %s131, 1
    %p135 = scmp.eq.s32.totalorder %s13, 1
    %p136 = scmp.ne.s32.totalorder %s131, %s133
    %p137 = scmp.eq.s32.totalorder %s13, 0
    %p138 = por %p136, %p137
    %p139 = scmp.ne.s32.totalorder %s131, %s133
    %p140 = scmp.eq.s32.totalorder %s18, 1
    %p141 = por %p139, %p140
    %p142 = scmp.ne.s32.totalorder %s133, %s134
    %p143 = scmp.eq.s32.totalorder %s18, 0
    %p144 = por %p142, %p143
    %p145 = scmp.ne.s32.totalorder %s133, %s134
    %p146 = scmp.eq.s32.totalorder %s19, 1
    %p147 = por %p145, %p146
    %p149 = scmp.ne.s32.totalorder %s134, %s148
    %p150 = scmp.eq.s32.totalorder %s19, 0
    %p151 = por %p149, %p150
    %s153 = sadd.s32 %s152, 1
    %p156 = scmp.eq.s32.totalorder %s13, 1
    %p157 = scmp.ne.s32.totalorder %s152, %s154
    %p158 = scmp.eq.s32.totalorder %s13, 0
    %p159 = por %p157, %p158
    %p160 = scmp.ne.s32.totalorder %s152, %s154
    %p161 = scmp.eq.s32.totalorder %s18, 1
    %p162 = por %p160, %p161
    %p163 = scmp.ne.s32.totalorder %s154, %s155
    %p164 = scmp.eq.s32.totalorder %s18, 0
    %p165 = por %p163, %p164
    %p166 = scmp.ne.s32.totalorder %s154, %s155
    %p167 = scmp.eq.s32.totalorder %s19, 1
    %p168 = por %p166, %p167
    %p170 = scmp.ne.s32.totalorder %s155, %s169
    %p171 = scmp.eq.s32.totalorder %s19, 0
    %p172 = por %p170, %p171
    %s173 = ssub.s32 %s13, %s20
    %p174 = scmp.eq.s32.totalorder %s173, 0
    %s176 = sadd.s32 %s175, 1
    %s177 = scalar_select %p174, %s175, %s176
    %p180 = pneg %p174
    %p181 = scmp.eq.s32.totalorder %s13, 1
    %p182 = por %p180, %p181
    %p183 = scmp.ne.s32.totalorder %s175, %s178
    %p184 = scmp.eq.s32.totalorder %s13, 0
    %p185 = por %p183, %p184
    %p186 = scmp.ne.s32.totalorder %s175, %s178
    %p187 = scmp.eq.s32.totalorder %s18, 1
    %p188 = por %p186, %p187
    %p189 = scmp.ne.s32.totalorder %s178, %s179
    %p190 = scmp.eq.s32.totalorder %s18, 0
    %p191 = por %p189, %p190
    %p192 = scmp.ne.s32.totalorder %s178, %s179
    %p193 = scmp.eq.s32.totalorder %s19, 1
    %p194 = por %p192, %p193
    %p196 = scmp.ne.s32.totalorder %s179, %s195
    %p197 = scmp.eq.s32.totalorder %s19, 0
    %p198 = por %p196, %p197
    %p199 = scmp.le.s32.totalorder 1, %s13
    %p200 = scmp.lt.s32.totalorder %s13, 3
    %p201 = pnand %p199, %p200
    %p202 = pneg %p201
    // Predicated region
    $region9: #{basic_block_pallas.1} parent=5 // pred_check
      _
    $region10: #{basic_block_pallas.1} parent=5 // pred_check_branch
      %204 = sbr.rel (%p201) target = $region12
    $region11: #{basic_block_pallas.1} parent=5 // pred_region
      %s205 = ssub.s32 %s13, 1
      // Predicated region
      $region13: #{basic_block_pallas.1} parent=11 // pred_check
        %p206 = pneg %p60
      $region14: #{basic_block_pallas.1} parent=11 // pred_check_branch
        %208 = sbr.rel (%p206) target = $region16
      $region15: #{basic_block_pallas.1} parent=11 // pred_region
        _
      $region16: #{basic_block_pallas.1} parent=11 // pred_fallthru
        _
      // Predicated region
      $region17: #{basic_block_pallas.1} parent=11 // pred_check
        %p209 = pneg %p81
      $region18: #{basic_block_pallas.1} parent=11 // pred_check_branch
        %211 = sbr.rel (%p209) target = $region20
      $region19: #{basic_block_pallas.1} parent=11 // pred_region
        _
      $region20: #{basic_block_pallas.1} parent=11 // pred_fallthru
        _
      // Predicated region
      $region21: #{basic_block_pallas.1} parent=11 // pred_check
        %p212 = pneg %p102
      $region22: #{basic_block_pallas.1} parent=11 // pred_check_branch
        %214 = sbr.rel (%p212) target = $region24
      $region23: #{basic_block_pallas.1} parent=11 // pred_region
        _
      $region24: #{basic_block_pallas.1} parent=11 // pred_fallthru
        _
      // Predicated region
      $region25: #{basic_block_pallas.1} parent=11 // pred_check
        %p215 = pneg %p123
      $region26: #{basic_block_pallas.1} parent=11 // pred_check_branch
        %217 = sbr.rel (%p215) target = $region28
      $region27: #{basic_block_pallas.1} parent=11 // pred_region
        _
      $region28: #{basic_block_pallas.1} parent=11 // pred_fallthru
        _
      // Predicated region
      $region29: #{basic_block_pallas.1} parent=11 // pred_check
        %p218 = pneg %p144
      $region30: #{basic_block_pallas.1} parent=11 // pred_check_branch
        %220 = sbr.rel (%p218) target = $region32
      $region31: #{basic_block_pallas.1} parent=11 // pred_region
        _
      $region32: #{basic_block_pallas.1} parent=11 // pred_fallthru
        _
      // Predicated region
      $region33: #{basic_block_pallas.1} parent=11 // pred_check
        %p221 = pneg %p165
      $region34: #{basic_block_pallas.1} parent=11 // pred_check_branch
        %223 = sbr.rel (%p221) target = $region36
      $region35: #{basic_block_pallas.1} parent=11 // pred_region
        _
      $region36: #{basic_block_pallas.1} parent=11 // pred_fallthru
        _
    $region12: #{basic_block_pallas.1} parent=5 // pred_fallthru
      _
    %p224 = scmp.lt.s32.totalorder %s13, 2
    // Predicated region
    $region37: #{basic_block_pallas.1} parent=5 // pred_check
      %p225 = pneg %p224
    $region38: #{basic_block_pallas.1} parent=5 // pred_check_branch
      %227 = sbr.rel (%p225) target = $region40
    $region39: #{basic_block_pallas.1} parent=5 // pred_region
      // Predicated region
      $region41: #{basic_block_pallas.1} parent=39 // pred_check
        %p228 = pneg %p33
      $region42: #{basic_block_pallas.1} parent=39 // pred_check_branch
        %230 = sbr.rel (%p228) target = $region44
      $region43: #{basic_block_pallas.1} parent=39 // pred_region
        %p231 = scmp.lt.s32.totalorder %s13, 1
        %s232 = scalar_select %p231, %s13, 1
        %s233 = smul.addr %s232, 2
        %s234 = smul.addr %s233, 8
        %s235 = scalar_lea.vmem %s0, %s234
      $region44: #{basic_block_pallas.1} parent=39 // pred_fallthru
        _
    $region40: #{basic_block_pallas.1} parent=5 // pred_fallthru
      _
    %p236 = scmp.le.s32.totalorder 1, %s13
    %p237 = scmp.lt.s32.totalorder %s13, 3
    %p238 = pnand %p236, %p237
    %p239 = pneg %p238
    // Predicated region
    $region45: #{basic_block_pallas.1} parent=5 // pred_check
      _
    $region46: #{basic_block_pallas.1} parent=5 // pred_check_branch
      %241 = sbr.rel (%p238) target = $region48
    $region47: #{basic_block_pallas.1} parent=5 // pred_region
      %s242 = ssub.s32 %s13, 1
      %p243 = scmp.lt.s32.totalorder %s18, 1
      %s244 = scalar_select %p243, %s18, 1
      %s245 = smul.addr %s244, 2
      %s246 = smul.addr %s245, 8
      %s247 = scalar_lea.vmem %s0, %s246
      %p248 = pneg %p39
      %p249 = pneg %p36
      %p250 = pneg %p60
      %p251 = pneg %p57
      %p252 = pneg %p81
      %p253 = pneg %p78
      %p254 = pneg %p102
      %p255 = pneg %p99
      %p256 = pneg %p123
      %p257 = pneg %p120
      %p258 = pneg %p144
      %p259 = pneg %p141
      %p260 = pneg %p165
      %p261 = pneg %p162
      %p262 = pneg %p191
      %p263 = pneg %p188
      %p264 = scmp.lt.s32.totalorder %s18, 1
      %s265 = scalar_select %p264, %s18, 1
      %s266 = smul.addr %s265, 2
      %s267 = smul.addr %s266, 8
      %s268 = scalar_lea.vmem %s7, %s267
      %p269 = scmp.lt.s32.totalorder %s18, 1
      %s270 = scalar_select %p269, %s18, 1
      %s271 = smul.addr %s270, 2
      %s272 = smul.addr %s271, 8
      %s273 = scalar_lea.vmem %s0, %s272
      %p274 = scmp.lt.s32.totalorder %s18, 1
      %s275 = scalar_select %p274, %s18, 1
      %s276 = smul.addr %s275, 2
      %s277 = smul.addr %s276, 8
      %s278 = scalar_lea.vmem %s7, %s277
      %v279 = vld [vmem:[%s273] sm:$0xff]
      %v280 = vld [vmem:[%s273 + $0x8] sm:$0xff]
      %v281 = vlaneseq
      %v282 = vand.u32 %v281, 127
      %v283 = vadd.s32 %v282, 128
      %vm284 = vcmp.lt.s32.totalorder %v282, 0
      %v285 = vsub.s32 0, %v282
      %v286 = vsel %vm284, %v285, %v282
      %v287 = vshrl.u32 %v286, 4
      %v288 = vand.u32 %v286, 15
      %v289 = vsub.s32 0, %v288
      %v290 = vsel %vm284, %v289, %v288
      %vm291 = vcmp.lt.s32.totalorder %v283, 0
      %v292 = vsub.s32 0, %v283
      %v293 = vsel %vm291, %v292, %v283
      %v294 = vshrl.u32 %v293, 4
      %v295 = vand.u32 %v293, 15
      %v296 = vsub.s32 0, %v295
      %v297 = vsel %vm291, %v296, %v295
      %vm298 = vcmp.ne.s32.totalorder %v290, 0
      %vm299 = vcmp.ne.s32.totalorder %v297, 0
      %vm300 = vcmp.lt.s32.totalorder %v290, 0
      %vm301 = vcmp.lt.s32.totalorder %v297, 0
      %vm302 = vmand %vm300, %vm298
      %vm303 = vmand %vm301, %vm299
      %v304 = vadd.s32 %v290, 16
      %v305 = vadd.s32 %v297, 16
      %v306 = vsel %vm302, %v304, %v290
      %v307 = vsel %vm303, %v305, %v297
      %vm308 = vcmp.ge.s32.totalorder %v306, 1
      %vm309 = vcmp.ge.s32.totalorder %v307, 1
      %vm310 = vcmp.le.s32.totalorder %v306, 14
      %vm311 = vcmp.le.s32.totalorder %v307, 14
      %v312 = vld [vmem:[%s3] sm:$0xff]
      %314 = vset.pattern.permute.xlu0 0
      %315 = vperm.xlu0 %314, %v312
      %v316 = vpop.permute.xlu0 %315
      %v318 = vmul.f32 %v279, %v316
      %v319 = vmul.f32 %v280, %v316
      %v320 = vld [vmem:[%s4] sm:$0xff]
      %322 = vset.pattern.permute.xlu0 0
      %323 = vperm.xlu0 %322, %v320
      %v324 = vpop.permute.xlu0 %323
      %v326 = vadd.f32 %v318, %v324
      %v327 = vadd.f32 %v319, %v324
      %v328 = vmax.f32 %v326, 0.0
      %v329 = vmax.f32 %v327, 0.0
      %332 = vrot.lane.b32.xlu0 %v328, 17
      %v333 = vpop.permute.xlu0 %332
      %334 = vrot.lane.b32.xlu0 %v329, 17
      %v335 = vpop.permute.xlu0 %334
      %vm336 = vcmask 138240
      %v337 = vsel %vm336, %v333, %v335
      %v340 = vsel %vm336, 0.0, %v333
      %v341 = vsel %vm308, %v340, 0.0
      %v342 = vsel %vm309, %v337, 0.0
      %343 = vst [vmem:[#allocation2] sm:$0xff] %v341
      %344 = vst [vmem:[#allocation2 + $0x8] sm:$0xff] %v342
      %345 = vrot.lane.b32.xlu0 %v328, 16
      %v346 = vpop.permute.xlu0 %345
      %347 = vrot.lane.b32.xlu0 %v329, 16
      %v348 = vpop.permute.xlu0 %347
      %vm349 = vcmask 130048
      %v350 = vsel %vm349, %v346, %v348
      %v353 = vsel %vm349, 0.0, %v346
      %354 = vst [vmem:[#allocation2 + $0x10] sm:$0xff] %v353
      %355 = vst [vmem:[#allocation2 + $0x18] sm:$0xff] %v350
      %356 = vrot.lane.b32.xlu0 %v328, 15
      %v357 = vpop.permute.xlu0 %356
      %358 = vrot.lane.b32.xlu0 %v329, 15
      %v359 = vpop.permute.xlu0 %358
      %vm360 = vcmask 121856
      %v361 = vsel %vm360, %v357, %v359
      %v364 = vsel %vm360, 0.0, %v357
      %v365 = vsel %vm310, %v364, 0.0
      %v366 = vsel %vm311, %v361, 0.0
      %367 = vst [vmem:[#allocation2 + $0x20] sm:$0xff] %v365
      %368 = vst [vmem:[#allocation2 + $0x28] sm:$0xff] %v366
      %369 = vrot.lane.b32.xlu0 %v328, 1
      %v370 = vpop.permute.xlu0 %369
      %371 = vrot.lane.b32.xlu0 %v329, 1
      %v372 = vpop.permute.xlu0 %371
      %vm373 = vcmask 7168
      %v374 = vsel %vm373, %v370, %v372
      %v377 = vsel %vm373, 0.0, %v370
      %v378 = vsel %vm308, %v377, 0.0
      %v379 = vsel %vm309, %v374, 0.0
      %380 = vst [vmem:[#allocation2 + $0x30] sm:$0xff] %v378
      %381 = vst [vmem:[#allocation2 + $0x38] sm:$0xff] %v379
      %382 = vst [vmem:[#allocation2 + $0x40] sm:$0xff] %v328
      %383 = vst [vmem:[#allocation2 + $0x48] sm:$0xff] %v329
      %384 = vrot.lane.b32.xlu0 %v328, 127
      %v385 = vpop.permute.xlu0 %384
      %386 = vrot.lane.b32.xlu0 %v329, 127
      %v387 = vpop.permute.xlu0 %386
      %vm388 = vcmask 1039360
      %v389 = vsel %vm388, %v385, %v387
      %v392 = vsel %vm388, %v387, 0.0
      %v393 = vsel %vm310, %v389, 0.0
      %v394 = vsel %vm311, %v392, 0.0
      %395 = vst [vmem:[#allocation2 + $0x50] sm:$0xff] %v393
      %396 = vst [vmem:[#allocation2 + $0x58] sm:$0xff] %v394
      %397 = vrot.lane.b32.xlu0 %v328, 113
      %v398 = vpop.permute.xlu0 %397
      %399 = vrot.lane.b32.xlu0 %v329, 113
      %v400 = vpop.permute.xlu0 %399
      %vm401 = vcmask 924672
      %v402 = vsel %vm401, %v398, %v400
      %v405 = vsel %vm401, %v400, 0.0
      %v406 = vsel %vm308, %v402, 0.0
      %v407 = vsel %vm309, %v405, 0.0
      %408 = vst [vmem:[#allocation2 + $0x60] sm:$0xff] %v406
      %409 = vst [vmem:[#allocation2 + $0x68] sm:$0xff] %v407
      %410 = vrot.lane.b32.xlu0 %v328, 112
      %v411 = vpop.permute.xlu0 %410
      %412 = vrot.lane.b32.xlu0 %v329, 112
      %v413 = vpop.permute.xlu0 %412
      %vm414 = vcmask 916480
      %v415 = vsel %vm414, %v411, %v413
      %v418 = vsel %vm414, %v413, 0.0
      %419 = vst [vmem:[#allocation2 + $0x70] sm:$0xff] %v415
      %420 = vst [vmem:[#allocation2 + $0x78] sm:$0xff] %v418
      %421 = vrot.lane.b32.xlu0 %v328, 111
      %v422 = vpop.permute.xlu0 %421
      %423 = vrot.lane.b32.xlu0 %v329, 111
      %v424 = vpop.permute.xlu0 %423
      %vm425 = vcmask 908288
      %v426 = vsel %vm425, %v422, %v424
      %v429 = vsel %vm425, %v424, 0.0
      %v430 = vsel %vm310, %v426, 0.0
      %v431 = vsel %vm311, %v429, 0.0
      %432 = vst [vmem:[#allocation2 + $0x80] sm:$0xff] %v430
      %433 = vst [vmem:[#allocation2 + $0x88] sm:$0xff] %v431
      %v434 = vld [vmem:[%s1] sm:$0xff]
      %v435 = vld [vmem:[#allocation2] sm:$0xff]
      %v436 = vld [vmem:[#allocation2 + $0x8] sm:$0xff]
      %v437 = vld [vmem:[#allocation2 + $0x10] sm:$0xff]
      %v438 = vld [vmem:[#allocation2 + $0x18] sm:$0xff]
      %v439 = vld [vmem:[#allocation2 + $0x20] sm:$0xff]
      %v440 = vld [vmem:[#allocation2 + $0x28] sm:$0xff]
      %v441 = vld [vmem:[#allocation2 + $0x30] sm:$0xff]
      %v442 = vld [vmem:[#allocation2 + $0x38] sm:$0xff]
      %v443 = vld [vmem:[#allocation2 + $0x40] sm:$0xff]
      %v444 = vld [vmem:[#allocation2 + $0x48] sm:$0xff]
      %v445 = vld [vmem:[#allocation2 + $0x50] sm:$0xff]
      %v446 = vld [vmem:[#allocation2 + $0x58] sm:$0xff]
      %v447 = vld [vmem:[#allocation2 + $0x60] sm:$0xff]
      %v448 = vld [vmem:[#allocation2 + $0x68] sm:$0xff]
      %v449 = vld [vmem:[#allocation2 + $0x70] sm:$0xff]
      %v450 = vld [vmem:[#allocation2 + $0x78] sm:$0xff]
      %v451 = vld [vmem:[#allocation2 + $0x80] sm:$0xff]
      %v452 = vld [vmem:[#allocation2 + $0x88] sm:$0xff]
      %vm453 = vcmask 588800
      %v455 = vsel %vm453, %v434, 0
      %457 = vmatprep.subr.mxu0 0.0
      %458 = vmatpush1.msra.mxu0 0.0
      %459 = vmatprep.subr.mxu0 0.0
      %460 = vmatpush1.msra.mxu0 0.0
      %461 = vmatprep.subr.mxu0 0.0
      %462 = vmatpush1.msra.mxu0 0.0
      %463 = vmatprep.subr.mxu0 0.0
      %464 = vmatpush1.msra.mxu0 0.0
      %465 = vmatprep.subr.mxu0 0.0
      %466 = vmatpush1.msra.mxu0 0.0
      %467 = vmatprep.subr.mxu0 0.0
      %468 = vmatpush1.msra.mxu0 0.0
      %469 = vmatprep.subr.mxu0 0.0
      %470 = vmatpush1.msra.mxu0 0.0
      %471 = vmatprep.subr.mxu0 %v452
      %472 = vmatpush1.msra.mxu0 %v451
      %473 = vmatprep.subr.mxu0 %v450
      %474 = vmatpush1.msra.mxu0 %v449
      %475 = vmatprep.subr.mxu0 %v448
      %476 = vmatpush1.msra.mxu0 %v447
      %477 = vmatprep.subr.mxu0 %v446
      %478 = vmatpush1.msra.mxu0 %v445
      %479 = vmatprep.subr.mxu0 %v444
      %480 = vmatpush1.msra.mxu0 %v443
      %481 = vmatprep.subr.mxu0 %v442
      %482 = vmatpush1.msra.mxu0 %v441
      %483 = vmatprep.subr.mxu0 %v440
      %484 = vmatpush1.msra.mxu0 %v439
      %485 = vmatprep.subr.mxu0 %v438
      %486 = vmatpush1.msra.mxu0 %v437
      %487 = vmatprep.subr.mxu0 %v436
      %488 = vmatpush1.msra.mxu0 %v435
      %489 = vmatprep.subr.mxu0 0.0
      %490 = vmatpush2.msra.mxu0 0.0
      %491 = vmatprep.subr.mxu0 0.0
      %492 = vmatpush2.msra.mxu0 0.0
      %493 = vmatprep.subr.mxu0 0.0
      %494 = vmatpush2.msra.mxu0 0.0
      %495 = vmatprep.subr.mxu0 0.0
      %496 = vmatpush2.msra.mxu0 0.0
      %497 = vmatprep.subr.mxu0 0.0
      %498 = vmatpush2.msra.mxu0 0.0
      %499 = vmatprep.subr.mxu0 0.0
      %500 = vmatpush2.msra.mxu0 0.0
      %501 = vmatprep.subr.mxu0 0.0
      %502 = vmatpush2.msra.mxu0 0.0
      %503 = vmatprep.subr.mxu0 0.0
      %504 = vmatpush2.msra.mxu0 0.0
      %505 = vmatprep.subr.mxu0 0.0
      %506 = vmatpush2.msra.mxu0 0.0
      %507 = vmatprep.subr.mxu0 0.0
      %508 = vmatpush2.msra.mxu0 0.0
      %509 = vmatprep.subr.mxu0 0.0
      %510 = vmatpush2.msra.mxu0 0.0
      %511 = vmatprep.subr.mxu0 0.0
      %512 = vmatpush2.msra.mxu0 0.0
      %513 = vmatprep.subr.mxu0 0.0
      %514 = vmatpush2.msra.mxu0 0.0
      %515 = vmatprep.subr.mxu0 0.0
      %516 = vmatpush2.msra.mxu0 0.0
      %517 = vmatprep.subr.mxu0 0.0
      %518 = vmatpush2.msra.mxu0 0.0
      %519 = vmatprep.subr.mxu0 0.0
      %520 = vmatpush2.msra.mxu0 0.0
      %521 = vmatprep.mubr.f32.mxu0 0.0
      %522 = vmatmul.mubr.f32.gmra.mxu0 %v455
      %v523 = vpop.f32.mrf.mxu0
      %v524 = vadd.f32 0.0, %v523
      %v525 = vpop.f32.mrf.mxu0
      %v526 = vadd.f32 0.0, %v525
      %527 = vdwg.mxu0
      %v528 = vld [vmem:[%s5] sm:$0xff]
      %530 = vset.pattern.permute.xlu0 0
      %531 = vperm.xlu0 %530, %v528
      %v532 = vpop.permute.xlu0 %531
      %v534 = vmul.f32 %v524, %v532
      %v535 = vmul.f32 %v526, %v532
      %v536 = vld [vmem:[%s6] sm:$0xff]
      %538 = vset.pattern.permute.xlu0 0
      %539 = vperm.xlu0 %538, %v536
      %v540 = vpop.permute.xlu0 %539
      %v542 = vadd.f32 %v534, %v540
      %v543 = vadd.f32 %v535, %v540
      %v544 = vmax.f32 %v542, 0.0
      %v545 = vmax.f32 %v543, 0.0
      %548 = vrot.lane.b32.xlu0 %v544, 17
      %v549 = vpop.permute.xlu0 %548
      %550 = vrot.lane.b32.xlu0 %v545, 17
      %v551 = vpop.permute.xlu0 %550
      %v552 = vsel %vm336, %v549, %v551
      %v555 = vsel %vm336, 0.0, %v549
      %v556 = vsel %vm308, %v555, 0.0
      %v557 = vsel %vm309, %v552, 0.0
      %558 = vst [vmem:[#allocation2] sm:$0xff] %v556
      %559 = vst [vmem:[#allocation2 + $0x8] sm:$0xff] %v557
      %560 = vrot.lane.b32.xlu0 %v544, 16
      %v561 = vpop.permute.xlu0 %560
      %562 = vrot.lane.b32.xlu0 %v545, 16
      %v563 = vpop.permute.xlu0 %562
      %v564 = vsel %vm349, %v561, %v563
      %v567 = vsel %vm349, 0.0, %v561
      %568 = vst [vmem:[#allocation2 + $0x10] sm:$0xff] %v567
      %569 = vst [vmem:[#allocation2 + $0x18] sm:$0xff] %v564
      %570 = vrot.lane.b32.xlu0 %v544, 15
      %v571 = vpop.permute.xlu0 %570
      %572 = vrot.lane.b32.xlu0 %v545, 15
      %v573 = vpop.permute.xlu0 %572
      %v574 = vsel %vm360, %v571, %v573
      %v577 = vsel %vm360, 0.0, %v571
      %v578 = vsel %vm310, %v577, 0.0
      %v579 = vsel %vm311, %v574, 0.0
      %580 = vst [vmem:[#allocation2 + $0x20] sm:$0xff] %v578
      %581 = vst [vmem:[#allocation2 + $0x28] sm:$0xff] %v579
      %582 = vrot.lane.b32.xlu0 %v544, 1
      %v583 = vpop.permute.xlu0 %582
      %584 = vrot.lane.b32.xlu0 %v545, 1
      %v585 = vpop.permute.xlu0 %584
      %v586 = vsel %vm373, %v583, %v585
      %v589 = vsel %vm373, 0.0, %v583
      %v590 = vsel %vm308, %v589, 0.0
      %v591 = vsel %vm309, %v586, 0.0
      %592 = vst [vmem:[#allocation2 + $0x30] sm:$0xff] %v590
      %593 = vst [vmem:[#allocation2 + $0x38] sm:$0xff] %v591
      %594 = vst [vmem:[#allocation2 + $0x40] sm:$0xff] %v544
      %595 = vst [vmem:[#allocation2 + $0x48] sm:$0xff] %v545
      %596 = vrot.lane.b32.xlu0 %v544, 127
      %v597 = vpop.permute.xlu0 %596
      %598 = vrot.lane.b32.xlu0 %v545, 127
      %v599 = vpop.permute.xlu0 %598
      %v600 = vsel %vm388, %v597, %v599
      %v603 = vsel %vm388, %v599, 0.0
      %v604 = vsel %vm310, %v600, 0.0
      %v605 = vsel %vm311, %v603, 0.0
      %606 = vst [vmem:[#allocation2 + $0x50] sm:$0xff] %v604
      %607 = vst [vmem:[#allocation2 + $0x58] sm:$0xff] %v605
      %608 = vrot.lane.b32.xlu0 %v544, 113
      %v609 = vpop.permute.xlu0 %608
      %610 = vrot.lane.b32.xlu0 %v545, 113
      %v611 = vpop.permute.xlu0 %610
      %v612 = vsel %vm401, %v609, %v611
      %v615 = vsel %vm401, %v611, 0.0
      %v616 = vsel %vm308, %v612, 0.0
      %v617 = vsel %vm309, %v615, 0.0
      %618 = vst [vmem:[#allocation2 + $0x60] sm:$0xff] %v616
      %619 = vst [vmem:[#allocation2 + $0x68] sm:$0xff] %v617
      %620 = vrot.lane.b32.xlu0 %v544, 112
      %v621 = vpop.permute.xlu0 %620
      %622 = vrot.lane.b32.xlu0 %v545, 112
      %v623 = vpop.permute.xlu0 %622
      %v624 = vsel %vm414, %v621, %v623
      %v627 = vsel %vm414, %v623, 0.0
      %628 = vst [vmem:[#allocation2 + $0x70] sm:$0xff] %v624
      %629 = vst [vmem:[#allocation2 + $0x78] sm:$0xff] %v627
      %630 = vrot.lane.b32.xlu0 %v544, 111
      %v631 = vpop.permute.xlu0 %630
      %632 = vrot.lane.b32.xlu0 %v545, 111
      %v633 = vpop.permute.xlu0 %632
      %v634 = vsel %vm425, %v631, %v633
      %v637 = vsel %vm425, %v633, 0.0
      %v638 = vsel %vm310, %v634, 0.0
      %v639 = vsel %vm311, %v637, 0.0
      %640 = vst [vmem:[#allocation2 + $0x80] sm:$0xff] %v638
      %641 = vst [vmem:[#allocation2 + $0x88] sm:$0xff] %v639
      %v642 = vld [vmem:[%s2] sm:$0xff]
      %v643 = vld [vmem:[#allocation2] sm:$0xff]
      %v644 = vld [vmem:[#allocation2 + $0x8] sm:$0xff]
      %v645 = vld [vmem:[#allocation2 + $0x10] sm:$0xff]
      %v646 = vld [vmem:[#allocation2 + $0x18] sm:$0xff]
      %v647 = vld [vmem:[#allocation2 + $0x20] sm:$0xff]
      %v648 = vld [vmem:[#allocation2 + $0x28] sm:$0xff]
      %v649 = vld [vmem:[#allocation2 + $0x30] sm:$0xff]
      %v650 = vld [vmem:[#allocation2 + $0x38] sm:$0xff]
      %v651 = vld [vmem:[#allocation2 + $0x40] sm:$0xff]
      %v652 = vld [vmem:[#allocation2 + $0x48] sm:$0xff]
      %v653 = vld [vmem:[#allocation2 + $0x50] sm:$0xff]
      %v654 = vld [vmem:[#allocation2 + $0x58] sm:$0xff]
      %v655 = vld [vmem:[#allocation2 + $0x60] sm:$0xff]
      %v656 = vld [vmem:[#allocation2 + $0x68] sm:$0xff]
      %v657 = vld [vmem:[#allocation2 + $0x70] sm:$0xff]
      %v658 = vld [vmem:[#allocation2 + $0x78] sm:$0xff]
      %v659 = vld [vmem:[#allocation2 + $0x80] sm:$0xff]
      %v660 = vld [vmem:[#allocation2 + $0x88] sm:$0xff]
      %v662 = vsel %vm453, %v642, 0
      %664 = vmatprep.subr.mxu0 0.0
      %665 = vmatpush1.msra.mxu0 0.0
      %666 = vmatprep.subr.mxu0 0.0
      %667 = vmatpush1.msra.mxu0 0.0
      %668 = vmatprep.subr.mxu0 0.0
      %669 = vmatpush1.msra.mxu0 0.0
      %670 = vmatprep.subr.mxu0 0.0
      %671 = vmatpush1.msra.mxu0 0.0
      %672 = vmatprep.subr.mxu0 0.0
      %673 = vmatpush1.msra.mxu0 0.0
      %674 = vmatprep.subr.mxu0 0.0
      %675 = vmatpush1.msra.mxu0 0.0
      %676 = vmatprep.subr.mxu0 0.0
      %677 = vmatpush1.msra.mxu0 0.0
      %678 = vmatprep.subr.mxu0 %v660
      %679 = vmatpush1.msra.mxu0 %v659
      %680 = vmatprep.subr.mxu0 %v658
      %681 = vmatpush1.msra.mxu0 %v657
      %682 = vmatprep.subr.mxu0 %v656
      %683 = vmatpush1.msra.mxu0 %v655
      %684 = vmatprep.subr.mxu0 %v654
      %685 = vmatpush1.msra.mxu0 %v653
      %686 = vmatprep.subr.mxu0 %v652
      %687 = vmatpush1.msra.mxu0 %v651
      %688 = vmatprep.subr.mxu0 %v650
      %689 = vmatpush1.msra.mxu0 %v649
      %690 = vmatprep.subr.mxu0 %v648
      %691 = vmatpush1.msra.mxu0 %v647
      %692 = vmatprep.subr.mxu0 %v646
      %693 = vmatpush1.msra.mxu0 %v645
      %694 = vmatprep.subr.mxu0 %v644
      %695 = vmatpush1.msra.mxu0 %v643
      %696 = vmatprep.subr.mxu0 0.0
      %697 = vmatpush2.msra.mxu0 0.0
      %698 = vmatprep.subr.mxu0 0.0
      %699 = vmatpush2.msra.mxu0 0.0
      %700 = vmatprep.subr.mxu0 0.0
      %701 = vmatpush2.msra.mxu0 0.0
      %702 = vmatprep.subr.mxu0 0.0
      %703 = vmatpush2.msra.mxu0 0.0
      %704 = vmatprep.subr.mxu0 0.0
      %705 = vmatpush2.msra.mxu0 0.0
      %706 = vmatprep.subr.mxu0 0.0
      %707 = vmatpush2.msra.mxu0 0.0
      %708 = vmatprep.subr.mxu0 0.0
      %709 = vmatpush2.msra.mxu0 0.0
      %710 = vmatprep.subr.mxu0 0.0
      %711 = vmatpush2.msra.mxu0 0.0
      %712 = vmatprep.subr.mxu0 0.0
      %713 = vmatpush2.msra.mxu0 0.0
      %714 = vmatprep.subr.mxu0 0.0
      %715 = vmatpush2.msra.mxu0 0.0
      %716 = vmatprep.subr.mxu0 0.0
      %717 = vmatpush2.msra.mxu0 0.0
      %718 = vmatprep.subr.mxu0 0.0
      %719 = vmatpush2.msra.mxu0 0.0
      %720 = vmatprep.subr.mxu0 0.0
      %721 = vmatpush2.msra.mxu0 0.0
      %722 = vmatprep.subr.mxu0 0.0
      %723 = vmatpush2.msra.mxu0 0.0
      %724 = vmatprep.subr.mxu0 0.0
      %725 = vmatpush2.msra.mxu0 0.0
      %726 = vmatprep.subr.mxu0 0.0
      %727 = vmatpush2.msra.mxu0 0.0
      %728 = vmatprep.mubr.f32.mxu0 0.0
      %729 = vmatmul.mubr.f32.gmra.mxu0 %v662
      %v730 = vpop.f32.mrf.mxu0
      %v731 = vadd.f32 %v279, %v730
      %v732 = vpop.f32.mrf.mxu0
      %v733 = vadd.f32 %v280, %v732
      %734 = vdwg.mxu0
      %735 = vst [vmem:[%s278] sm:$0xff] %v731
      %736 = vst [vmem:[%s278 + $0x8] sm:$0xff] %v733
      %p737 = scmp.lt.s32.totalorder %s18, 1
      %s738 = scalar_select %p737, %s18, 1
      %s739 = smul.addr %s738, 2
      %s740 = smul.addr %s739, 8
      %s741 = scalar_lea.vmem %s7, %s740
      // Predicated region
      $region49: #{basic_block_pallas.1} parent=47 // pred_check
        %p742 = pneg %p188
      $region50: #{basic_block_pallas.1} parent=47 // pred_check_branch
        %744 = sbr.rel (%p742) target = $region52
      $region51: #{basic_block_pallas.1} parent=47 // pred_region
        _
      $region52: #{basic_block_pallas.1} parent=47 // pred_fallthru
        _
    $region48: #{basic_block_pallas.1} parent=5 // pred_fallthru
      _
    %p745 = scmp.le.s32.totalorder 2, %s13
    // Predicated region
    $region53: #{basic_block_pallas.1} parent=5 // pred_check
      %p746 = pneg %p745
    $region54: #{basic_block_pallas.1} parent=5 // pred_check_branch
      %748 = sbr.rel (%p746) target = $region56
    $region55: #{basic_block_pallas.1} parent=5 // pred_region
      %s749 = ssub.s32 %s13, 2
      // Predicated region
      $region57: #{basic_block_pallas.1} parent=55 // pred_check
        %p750 = pneg %p194
      $region58: #{basic_block_pallas.1} parent=55 // pred_check_branch
        %752 = sbr.rel (%p750) target = $region60
      $region59: #{basic_block_pallas.1} parent=55 // pred_region
        %p753 = scmp.lt.s32.totalorder %s19, 1
        %s754 = scalar_select %p753, %s19, 1
        %s755 = smul.addr %s754, 2
        %s756 = smul.addr %s755, 8
        %s757 = scalar_lea.vmem %s7, %s756
      $region60: #{basic_block_pallas.1} parent=55 // pred_fallthru
        _
    $region56: #{basic_block_pallas.1} parent=5 // pred_fallthru
      _
  $region6: #{basic_block_pallas.1} parent=0 // loop_footer
    %s17 = sadd.s32 1, %s13
  $region7: #{basic_block_pallas.1} parent=0 // loop_footer_branch
    %12 = sbr.rel target = $region3
  $region8: #{basic_block_pallas.1} parent=0 // loop_exit
    _

</llo_original>
